<compile_context>
chip_gen: v6e
topology: v6e:2x2x1
jax: 0.10.0
libtpu: 0.0.40
codegen_flags: <defaults>
</compile_context>

<pallas_src>
import functools

import jax
import jax.numpy as jnp
from jax.experimental import pallas as pl
from jax.experimental.pallas import tpu as pltpu

BN_EPS = 1e-5  # nn.BatchNorm1d default


# ----------------------------------------------------------------------------
# Kernel: one GEMM tile + f32 bias (BN and head-averaging already folded)
# ----------------------------------------------------------------------------
def _fused_head_kernel(x_ref, w_ref, b_ref, o_ref):
    # Cast x to the compute dtype here (no wrapper-side pad/cast pass over x).
    x = x_ref[...].astype(w_ref.dtype)
    acc = jnp.dot(x, w_ref[...], preferred_element_type=jnp.float32)
    o_ref[...] = (acc + b_ref[...]).astype(o_ref.dtype)


# ----------------------------------------------------------------------------
# Helpers
# ----------------------------------------------------------------------------
def _round_up(n, m):
    return ((n + m - 1) // m) * m


def _fold_norm_linear(head):
    """Fold BN(inference) into Linear.  Returns W' (dim, nc) and b' (nc,), f32."""
    mean = head["running_mean"].astype(jnp.float32)
    var = head["running_var"].astype(jnp.float32)
    gamma = head["bn_weight"].astype(jnp.float32)
    beta = head["bn_bias"].astype(jnp.float32)
    w = head["weight"].astype(jnp.float32)        # (nc, dim)
    b = head["bias"].astype(jnp.float32)          # (nc,)

    scale = gamma * jax.lax.rsqrt(var + BN_EPS)   # (dim,)
    shift = beta - mean * scale                   # (dim,)
    w_fused = (w * scale[None, :]).T              # (dim, nc) — lane-dense output
    b_fused = w @ shift + b                       # (nc,)
    return w_fused, b_fused


def prepare_fused_head(params, distillation=False, compute_dtype=jnp.bfloat16):
    """One-time (model-prep) parameter fusion.

    Fold BN into the Linear, average the two heads for distillation inference,
    transpose to (dim, nc), pad the class dim to a multiple of 128 and cast the
    weight to the MXU compute dtype.  Cache the result — do NOT call per step.
    Returns (w_fused (dim, nc_pad) compute_dtype, b_fused (1, nc_pad) f32, nc).
    """
    w, b = _fold_norm_linear(params["head"])
    if distillation:
        w2, b2 = _fold_norm_linear(params["head_dist"])
        w = 0.5 * (w + w2)
        b = 0.5 * (b + b2)
    nc = w.shape[1]
    nc_pad = _round_up(max(nc, 1), 128)
    w_p = jnp.pad(w, ((0, 0), (0, nc_pad - nc))).astype(compute_dtype)
    b_p = jnp.pad(b, (0, nc_pad - nc)).reshape(1, nc_pad).astype(jnp.float32)
    return w_p, b_p, nc


def _choose_tiles(B, dim, nc_pad, x_itemsize, w_itemsize, out_itemsize):
    # Batch tile: multiple of 16 (bf16 packs 16 rows/vreg); 512 for huge batches
    # (multiple of 256 for full MXU M tiles and >=2 batch programs).
    if B <= 1024:
        tb = _round_up(B, 16)
    else:
        tb = 512
    # Class tile: lane-dense multiple of 128; bound each weight buffer to
    # <=4 MiB so default double-buffering stays v7x-VMEM-safe for any head.
    per_buf = 4 << 20
    tn_cap = max(128, ((per_buf // max(1, dim * w_itemsize)) // 128) * 128)
    tn = min(nc_pad, tn_cap, 2048)
    if pl.cdiv(B, tb) == 1 and nc_pad >= 256:
        # Small-batch inference: split classes so both v7x TensorCores get work.
        tn = min(tn, _round_up(pl.cdiv(nc_pad, 2), 128))
    # Keep the (double-buffered) x + output tiles bounded as well.
    while tb > 16 and 2 * (tb * dim * x_itemsize + tb * tn * out_itemsize) > (16 << 20):
        tb = max(16, _round_up(tb // 2, 16))
    return tb, tn


# ----------------------------------------------------------------------------
# Jitted forward: ONLY the Pallas GEMM (+ tiny class slice)
# ----------------------------------------------------------------------------
@functools.partial(jax.jit, static_argnames=("num_classes", "out_dtype"))
def repvit_classifier_forward(x, w_fused, b_fused, num_classes, out_dtype=None):
    """Inference forward of RepVitClassifier with pre-fused parameters.

    head_drop is identity (eval / drop=0.0).  `w_fused`/`b_fused` come from
    `prepare_fused_head` (BN folded, distillation heads averaged, 128-padded).
    """
    assert x.ndim == 2, "classifier head expects pooled (N, C) input"
    B, dim = x.shape
    nc_pad = w_fused.shape[1]
    if out_dtype is None:
        out_dtype = w_fused.dtype
    out_dtype = jnp.dtype(out_dtype)

    tb, tn = _choose_tiles(B, dim, nc_pad,
                           jnp.dtype(x.dtype).itemsize,
                           jnp.dtype(w_fused.dtype).itemsize,
                           out_dtype.itemsize)
    grid_b = pl.cdiv(B, tb)
    grid_n = pl.cdiv(nc_pad, tn)

    cost = pl.CostEstimate(
        flops=2 * B * dim * nc_pad,
        transcendentals=0,
        bytes_accessed=int(B * dim * jnp.dtype(x.dtype).itemsize
                           + dim * nc_pad * jnp.dtype(w_fused.dtype).itemsize
                           + nc_pad * 4
                           + B * nc_pad * out_dtype.itemsize))

    # Grid: classes outer, batch inner -> the weight tile is held across the
    # inner batch loop and streamed exactly once overall.  Both axes are
    # independent (distinct output blocks), hence "parallel" for megacore.
    # NOTE: with tn bounded to <=4 MiB/buffer, default double-buffering of the
    # (grid-invariant) weight costs <=8 MiB of VMEM, so explicit
    # single-buffering (pl.Buffered(1)) is unnecessary here.
    out_pad = pl.pallas_call(
        _fused_head_kernel,
        out_shape=jax.ShapeDtypeStruct((B, nc_pad), out_dtype),
        grid=(grid_n, grid_b),
        in_specs=[
            pl.BlockSpec((tb, dim), lambda j, i: (i, 0)),   # x tile (cast in-kernel)
            pl.BlockSpec((dim, tn), lambda j, i: (0, j)),   # fused weight tile
            pl.BlockSpec((1, tn), lambda j, i: (0, j)),     # f32 bias tile
        ],
        out_specs=pl.BlockSpec((tb, tn), lambda j, i: (i, j)),
        compiler_params=pltpu.CompilerParams(
            dimension_semantics=("parallel", "parallel"),
            vmem_limit_bytes=32 * 1024 * 1024),
        cost_estimate=cost,
    )(x, w_fused, b_fused)

    if num_classes == nc_pad:
        return out_pad
    # Consumers doing softmax/argmax may instead take the padded logits
    # directly (padded classes are exact zeros of W', bias 0) to skip this copy.
    return out_pad[:, :num_classes]


# ----------------------------------------------------------------------------
# Deterministic parameter construction (mirrors NormLinear.__init__ shapes)
# ----------------------------------------------------------------------------
def make_norm_linear_params(key, dim, num_classes, std=0.02):
    k_w, k_m, k_v, k_g, k_b = jax.random.split(key, 5)
    w = std * jax.random.truncated_normal(k_w, -2.0, 2.0, (num_classes, dim),
                                          dtype=jnp.float32)
    return {
        "weight": w,                                            # Linear.weight
        "bias": jnp.zeros((num_classes,), jnp.float32),         # Linear.bias = 0
        "running_mean": 0.1 * jax.random.normal(k_m, (dim,), jnp.float32),
        "running_var": 0.5 + jnp.abs(jax.random.normal(k_v, (dim,), jnp.float32)),
        "bn_weight": 1.0 + 0.1 * jax.random.normal(k_g, (dim,), jnp.float32),
        "bn_bias": 0.1 * jax.random.normal(k_b, (dim,), jnp.float32),
    }


def make_repvit_classifier_params(key, dim, num_classes, distillation=False):
    k1, k2 = jax.random.split(key)
    params = {"head": make_norm_linear_params(k1, dim, num_classes)}
    if distillation:
        params["head_dist"] = make_norm_linear_params(k2, dim, num_classes)
    return params


# ----------------------------------------------------------------------------
# Pure-JAX (un-fused, f32) reference for verification
# ----------------------------------------------------------------------------
def _norm_linear_ref(x, p):
    scale = p["bn_weight"] / jnp.sqrt(p["running_var"] + BN_EPS)
    xb = (x - p["running_mean"]) * scale + p["bn_bias"]
    return xb @ p["weight"].T + p["bias"]


def repvit_classifier_ref(x, params, distillation=False):
    if distillation:
        x1 = _norm_linear_ref(x, params["head"])
        x2 = _norm_linear_ref(x, params["head_dist"])
        return (x1 + x2) / 2
    return _norm_linear_ref(x, params["head"])


# ----------------------------------------------------------------------------
if __name__ == "__main__":
    key = jax.random.PRNGKey(0)
    k_x, k_p1, k_p2 = jax.random.split(key, 3)

    B, DIM, NUM_CLASSES = 8, 32, 16
    x = jax.random.normal(k_x, (B, DIM), dtype=jnp.float32)

    ok = True

    # --- no distillation, f32 compute path: tight check ----------------------
    params = make_repvit_classifier_params(k_p1, DIM, NUM_CLASSES,
                                           distillation=False)
    w_f32, b_f32, nc = prepare_fused_head(params, distillation=False,
                                          compute_dtype=jnp.float32)
    out = repvit_classifier_forward(x, w_f32, b_f32, num_classes=nc)
    out = jax.block_until_ready(out)
    ref = repvit_classifier_ref(x, params, distillation=False)
    ok &= bool(jnp.allclose(out, ref, atol=1e-4, rtol=1e-4))
    ok &= out.shape == (B, NUM_CLASSES)

    # --- awkward batch (not a multiple of 8): masked last-block path ---------
    x_odd = x[:5]
    out_odd = jax.block_until_ready(
        repvit_classifier_forward(x_odd, w_f32, b_f32, num_classes=nc))
    ok &= bool(jnp.allclose(out_odd, ref[:5], atol=1e-4, rtol=1e-4))
    ok &= out_odd.shape == (5, NUM_CLASSES)

    # --- distillation (inference: averaged heads), f32 compute path ----------
    params_d = make_repvit_classifier_params(k_p2, DIM, NUM_CLASSES,
                                             distillation=True)
    wd_f32, bd_f32, _ = prepare_fused_head(params_d, distillation=True,
                                           compute_dtype=jnp.float32)
    out_d = jax.block_until_ready(
        repvit_classifier_forward(x, wd_f32, bd_f32, num_classes=nc))
    ref_d = repvit_classifier_ref(x, params_d, distillation=True)
    ok &= bool(jnp.allclose(out_d, ref_d, atol=1e-4, rtol=1e-4))
    ok &= out_d.shape == (B, NUM_CLASSES)

    # --- production path: bf16 weights, bf16 MXU compute, bf16 output --------
    wd_bf, bd_bf, _ = prepare_fused_head(params_d, distillation=True)  # bf16
    out_bf = jax.block_until_ready(
        repvit_classifier_forward(x, wd_bf, bd_bf, num_classes=nc))
    ok &= out_bf.dtype == jnp.bfloat16
    ok &= bool(jnp.allclose(out_bf.astype(jnp.float32), ref_d,
                            atol=3e-2, rtol=3e-2))
    ok &= out_bf.shape == (B, NUM_CLASSES)

    if ok:
        print("KERNEL_OK")
    else:
        print("KERNEL_MISMATCH")
</pallas_src>

<mosaic_0001>
module attributes {stable_mosaic.version = 11 : i64} {
  func.func @_fused_head_kernel(%arg0: i32, %arg1: i32, %arg2: memref<16x32xf32, #tpu.memory_space<vmem>>, %arg3: memref<32x128xf32, #tpu.memory_space<vmem>>, %arg4: memref<1x128xf32, #tpu.memory_space<vmem>>, %arg5: memref<16x128xf32, #tpu.memory_space<vmem>>) attributes {dimension_semantics = [#tpu.dimension_semantics<parallel>, #tpu.dimension_semantics<parallel>], iteration_bounds = array<i64: 1, 1>, scalar_prefetch = 0 : i64, scratch_operands = 0 : i64, tpu.core_type = #tpu.core_type<tc>, window_params = [{transform_indices = @transform_0, window_bounds = array<i64: 16, 32>}, {transform_indices = @transform_1, window_bounds = array<i64: 32, 128>}, {transform_indices = @transform_2, window_bounds = array<i64: 1, 128>}, {transform_indices = @transform_3, window_bounds = array<i64: 16, 128>}]} {
    %c0 = arith.constant 0 : index
    %c0_0 = arith.constant 0 : index
    %0 = vector.load %arg2[%c0, %c0_0] : memref<16x32xf32, #tpu.memory_space<vmem>>, vector<16x32xf32>
    %c0_1 = arith.constant 0 : index
    %c0_2 = arith.constant 0 : index
    %1 = vector.load %arg3[%c0_1, %c0_2] : memref<32x128xf32, #tpu.memory_space<vmem>>, vector<32x128xf32>
    %cst = arith.constant dense<0.000000e+00> : vector<16x128xf32>
    %2 = tpu.matmul %0, %1, %cst {dimension_numbers = #tpu.dot_dimension_numbers<[1], [0], [0], [1], [0, 0, 1, 1], [], []>} : vector<16x32xf32>, vector<32x128xf32>, vector<16x128xf32> -> vector<16x128xf32>
    %c0_3 = arith.constant 0 : index
    %c0_4 = arith.constant 0 : index
    %3 = vector.load %arg4[%c0_3, %c0_4] : memref<1x128xf32, #tpu.memory_space<vmem>>, vector<1x128xf32>
    %4 = vector.broadcast %3 : vector<1x128xf32> to vector<16x128xf32>
    %5 = arith.addf %2, %4 : vector<16x128xf32>
    %c0_5 = arith.constant 0 : index
    %c0_6 = arith.constant 0 : index
    %6 = vector.load %arg5[%c0_5, %c0_6] : memref<16x128xf32, #tpu.memory_space<vmem>>, vector<16x128xf32>
    tpu.vector_store %arg5[%c0_5, %c0_6], %5 {strides = array<i32>} : memref<16x128xf32, #tpu.memory_space<vmem>>, vector<16x128xf32>,
    return
  }
  func.func @transform_0(%arg0: i32, %arg1: i32) -> (i32, i32) {
    %c0_i32 = arith.constant 0 : i32
    %c0_i32_0 = arith.constant 0 : i32
    return %arg1, %c0_i32 : i32, i32
  }
  func.func @transform_1(%arg0: i32, %arg1: i32) -> (i32, i32) {
    %c0_i32 = arith.constant 0 : i32
    %c0_i32_0 = arith.constant 0 : i32
    return %c0_i32, %arg0 : i32, i32
  }
  func.func @transform_2(%arg0: i32, %arg1: i32) -> (i32, i32) {
    %c0_i32 = arith.constant 0 : i32
    %c0_i32_0 = arith.constant 0 : i32
    return %c0_i32, %arg0 : i32, i32
  }
  func.func @transform_3(%arg0: i32, %arg1: i32) -> (i32, i32) {
    %c0_i32 = arith.constant 0 : i32
    return %arg1, %arg0 : i32, i32
  }
}

</mosaic_0001>

<llo_original>
// kernel: repvit_classifier_forward.1
$region0: #{repvit_classifier_forward.1}
  #allocation0 [shape = 'u32[]', space=smem, size = 0x4, offset = 0x4, fixed_abs, tag = 'smem constant byte address 0x4 - core index']
  #allocation1 [shape = 'u32[144,128]{1,0:T(1,128)}', space=vmem, size = 0x12000, scoped, tag = 'internal scratch']
  %s0 = inlined_call_operand.hbm [shape: f32[8,32], index: 0, kind: input, shape index: {}]
  %s1 = inlined_call_operand.hbm [shape: f32[32,128], index: 1, kind: input, shape index: {}]
  %s2 = inlined_call_operand.vmem [shape: f32[1,128], index: 2, kind: input, shape index: {}]
  %s3 = inlined_call_operand.hbm [shape: f32[8,128], index: 3, kind: output, shape index: {}]
  %s4 = sld [smem:[#allocation0]]
  $region30: #{repvit_classifier_forward.1} parent=0
    _
  %s6 = ssub.s32 1, %s4
  %s7 = scalar_select 0, %s6, %s4
  $region1: #{repvit_classifier_forward.1} parent=0
    #allocation2 [shape = 'u8[8192]{0}', space=vmem, size = 0x2000, scoped, tag = 'input window, operand 0, single buffered']
    #allocation3 [shape = 's32[1]{0}', space=sflag, size = 0x4, scoped, tag = 'scoped memory for repvit_classifier_forward.1']
    #allocation4 [shape = 's32[1]{0}', space=sflag, size = 0x4, scoped, tag = 'scoped memory for repvit_classifier_forward.1']
    #allocation5 [shape = 'u8[16384]{0}', space=vmem, size = 0x4000, scoped, tag = 'input window, operand 1, single buffered']
    #allocation6 [shape = 's32[1]{0}', space=sflag, size = 0x4, scoped, tag = 'scoped memory for repvit_classifier_forward.1']
    #allocation7 [shape = 'u8[8192]{0}', space=vmem, size = 0x2000, scoped, tag = 'output window, operand 0, single buffered']
    %8 = vsyncpa [#allocation3], 0
    %9 = vsyncpa [#allocation6], 0
    %10 = vsyncpa [#allocation4], 0
    // Predicated region
    $region2: #{repvit_classifier_forward.1} parent=1 // pred_check
      _
    $region3: #{repvit_classifier_forward.1} parent=1 // pred_check_branch
      %12 = sbr.rel (0) target = $region5
    $region4: #{repvit_classifier_forward.1} parent=1 // pred_region
      %s14 = ssub.s32 256, 128
      %15 = vsyncadd [#allocation3], %s14
      %s16 = sshll.u32 [#allocation2], 4
      %s17 = int_to_ptr.vmem [resolvable:$true] %s16
      %22 = dma.hbm_to_vmem [thread:$0]  %s0, 128, %s17, [#allocation3], 128, 128, 8
    $region5: #{repvit_classifier_forward.1} parent=1 // pred_fallthru
      _
    // Predicated region
    $region6: #{repvit_classifier_forward.1} parent=1 // pred_check
      _
    $region7: #{repvit_classifier_forward.1} parent=1 // pred_check_branch
      %24 = sbr.rel (0) target = $region9
    $region8: #{repvit_classifier_forward.1} parent=1 // pred_region
      %s26 = ssub.s32 512, 512
      %27 = vsyncadd [#allocation6], %s26
      %s28 = sshll.u32 [#allocation5], 4
      %s29 = int_to_ptr.vmem [resolvable:$true] %s28
      %34 = dma.hbm_to_vmem [thread:$0]  %s1, 512, %s29, [#allocation6], 128, 128, 8
    $region9: #{repvit_classifier_forward.1} parent=1 // pred_fallthru
      _
    // Predicated region
    $region10: #{repvit_classifier_forward.1} parent=1 // pred_check
      _
    $region11: #{repvit_classifier_forward.1} parent=1 // pred_check_branch
      %36 = sbr.rel (0) target = $region13
    $region12: #{repvit_classifier_forward.1} parent=1 // pred_region
      _
    $region13: #{repvit_classifier_forward.1} parent=1 // pred_fallthru
      _
    // Predicated region
    $region14: #{repvit_classifier_forward.1} parent=1 // pred_check
      _
    $region15: #{repvit_classifier_forward.1} parent=1 // pred_check_branch
      %38 = sbr.rel (0) target = $region17
    $region16: #{repvit_classifier_forward.1} parent=1 // pred_region
      %39 = dma.done [#allocation3], 256
    $region17: #{repvit_classifier_forward.1} parent=1 // pred_fallthru
      _
    // Predicated region
    $region18: #{repvit_classifier_forward.1} parent=1 // pred_check
      _
    $region19: #{repvit_classifier_forward.1} parent=1 // pred_check_branch
      %41 = sbr.rel (0) target = $region21
    $region20: #{repvit_classifier_forward.1} parent=1 // pred_region
      %42 = dma.done [#allocation6], 512
    $region21: #{repvit_classifier_forward.1} parent=1 // pred_fallthru
      _
    %v43 = vld [vmem:[#allocation2] sm:$0xff]
    %v44 = vld [vmem:[#allocation2 + $0x8] sm:$0xff]
    %v45 = vld [vmem:[#allocation5] sm:$0xff]
    %v46 = vld [vmem:[#allocation5 + $0x8] sm:$0xff]
    %v47 = vld [vmem:[#allocation5 + $0x10] sm:$0xff]
    %v48 = vld [vmem:[#allocation5 + $0x18] sm:$0xff]
    %v49 = vld [vmem:[%s2] sm:$0x1]
    %v51 = vlaneseq
    %v52 = vshrl.u32 %v51, 7
    %v53 = vsub.s32 0, %v52
    %v54 = vrot.slane %v49, %v53
    %vm56 = vcmask 261120
    %v58 = vsel %vm56, %v43, 0
    %v61 = vsel %vm56, %v44, 0
    %63 = vmatprep.subr.mxu0 0.0
    %64 = vmatpush1.msra.mxu0 0.0
    %65 = vmatprep.subr.mxu0 0.0
    %66 = vmatpush1.msra.mxu0 0.0
    %67 = vmatprep.subr.mxu0 0.0
    %68 = vmatpush1.msra.mxu0 0.0
    %69 = vmatprep.subr.mxu0 0.0
    %70 = vmatpush1.msra.mxu0 0.0
    %71 = vmatprep.subr.mxu0 0.0
    %72 = vmatpush1.msra.mxu0 0.0
    %73 = vmatprep.subr.mxu0 0.0
    %74 = vmatpush1.msra.mxu0 0.0
    %75 = vmatprep.subr.mxu0 0.0
    %76 = vmatpush1.msra.mxu0 0.0
    %77 = vmatprep.subr.mxu0 0.0
    %78 = vmatpush1.msra.mxu0 0.0
    %79 = vmatprep.subr.mxu0 0.0
    %80 = vmatpush1.msra.mxu0 0.0
    %81 = vmatprep.subr.mxu0 0.0
    %82 = vmatpush1.msra.mxu0 0.0
    %83 = vmatprep.subr.mxu0 0.0
    %84 = vmatpush1.msra.mxu0 0.0
    %85 = vmatprep.subr.mxu0 0.0
    %86 = vmatpush1.msra.mxu0 0.0
    %87 = vmatprep.subr.mxu0 0.0
    %88 = vmatpush1.msra.mxu0 %v48
    %89 = vmatprep.subr.mxu0 0.0
    %90 = vmatpush1.msra.mxu0 %v47
    %91 = vmatprep.subr.mxu0 0.0
    %92 = vmatpush1.msra.mxu0 %v46
    %93 = vmatprep.subr.mxu0 0.0
    %94 = vmatpush1.msra.mxu0 %v45
    %95 = vmatprep.subr.mxu0 0.0
    %96 = vmatpush2.msra.mxu0 0.0
    %97 = vmatprep.subr.mxu0 0.0
    %98 = vmatpush2.msra.mxu0 0.0
    %99 = vmatprep.subr.mxu0 0.0
    %100 = vmatpush2.msra.mxu0 0.0
    %101 = vmatprep.subr.mxu0 0.0
    %102 = vmatpush2.msra.mxu0 0.0
    %103 = vmatprep.subr.mxu0 0.0
    %104 = vmatpush2.msra.mxu0 0.0
    %105 = vmatprep.subr.mxu0 0.0
    %106 = vmatpush2.msra.mxu0 0.0
    %107 = vmatprep.subr.mxu0 0.0
    %108 = vmatpush2.msra.mxu0 0.0
    %109 = vmatprep.subr.mxu0 0.0
    %110 = vmatpush2.msra.mxu0 0.0
    %111 = vmatprep.subr.mxu0 0.0
    %112 = vmatpush2.msra.mxu0 0.0
    %113 = vmatprep.subr.mxu0 0.0
    %114 = vmatpush2.msra.mxu0 0.0
    %115 = vmatprep.subr.mxu0 0.0
    %116 = vmatpush2.msra.mxu0 0.0
    %117 = vmatprep.subr.mxu0 0.0
    %118 = vmatpush2.msra.mxu0 0.0
    %119 = vmatprep.subr.mxu0 0.0
    %120 = vmatpush2.msra.mxu0 0.0
    %121 = vmatprep.subr.mxu0 0.0
    %122 = vmatpush2.msra.mxu0 0.0
    %123 = vmatprep.subr.mxu0 0.0
    %124 = vmatpush2.msra.mxu0 0.0
    %125 = vmatprep.subr.mxu0 0.0
    %126 = vmatpush2.msra.mxu0 0.0
    %127 = vmatprep.mubr.f32.mxu0 0.0
    %128 = vmatmul.mubr.f32.gmra.mxu0 %v58
    %v129 = vpop.f32.mrf.mxu0
    %v130 = vadd.f32 %v54, %v129
    %v131 = vpop.f32.mrf.mxu0
    %132 = vmatprep.mubr.f32.mxu0 0.0
    %133 = vmatmul.mubr.f32.gmra.mxu0 %v61
    %v134 = vpop.f32.mrf.mxu0
    %v135 = vadd.f32 %v54, %v134
    %v136 = vpop.f32.mrf.mxu0
    %137 = vdwg.mxu0
    %138 = vst [vmem:[#allocation7] sm:$0xff] %v130
    %139 = vst [vmem:[#allocation7 + $0x8] sm:$0xff] %v135
    // Predicated region
    $region22: #{repvit_classifier_forward.1} parent=1 // pred_check
      _
    $region23: #{repvit_classifier_forward.1} parent=1 // pred_check_branch
      %141 = sbr.rel (0) target = $region25
    $region24: #{repvit_classifier_forward.1} parent=1 // pred_region
      %s143 = ssub.s32 256, 128
      %144 = vsyncadd [#allocation4], %s143
      %s145 = sshll.u32 [#allocation7], 4
      %s146 = int_to_ptr.vmem [resolvable:$true] %s145
      %151 = dma.vmem_to_hbm [thread:$0]  %s146, 128, %s3, [#allocation4], 128, 128, 8
    $region25: #{repvit_classifier_forward.1} parent=1 // pred_fallthru
      _
    // Predicated region
    $region26: #{repvit_classifier_forward.1} parent=1 // pred_check
      _
    $region27: #{repvit_classifier_forward.1} parent=1 // pred_check_branch
      %153 = sbr.rel (0) target = $region29
    $region28: #{repvit_classifier_forward.1} parent=1 // pred_region
      %154 = dma.done [#allocation4], 256
    $region29: #{repvit_classifier_forward.1} parent=1 // pred_fallthru
      _
    %155 = vsyncpa [#allocation3], 1
    %156 = vsyncpa [#allocation6], 1
    %157 = vsyncpa [#allocation4], 1

</llo_original>
